<compile_context>
chip_gen: v7x
topology: tpu7x:2x2x1
jax: 0.10.0
libtpu: 0.0.40
codegen_flags: <defaults>
</compile_context>

<pallas_src>
import functools

import jax
import jax.numpy as jnp
import numpy as np
from jax.experimental import pallas as pl
from jax.experimental.pallas import tpu as pltpu


# ----------------------------------------------------------------------------
# Fused kernel: weight generation + unfold/weighted-sum aggregation.
# One grid step handles `BT` whole images (all groups, all channels).
# ----------------------------------------------------------------------------
def _involution_fused_kernel(x_ref, w1t_ref, bnsh_ref, w2t_ref, b2_ref, mask_ref,
                             o_ref, *, kernel_size, width):
    K = kernel_size
    KK = K * K
    padK = (K - 1) // 2
    BT, C, HWp = o_ref.shape

    # Loop-invariant tiny operands, hoisted once per grid step.
    w1t = w1t_ref[...]            # (Crp, C)  bf16, BN scale folded into conv1
    bnsh = bnsh_ref[...]          # (Crp, 1)  f32 fused BN shift (conv1 has no bias)

    def body(i, carry):
        x = x_ref[i]                                           # (C, HWp) f32

        # ---- weight generation: h = relu(bn(conv1(x))) -----------------------
        h = jnp.dot(w1t, x.astype(jnp.bfloat16),
                    preferred_element_type=jnp.float32)        # (Crp, HWp)
        h = jnp.maximum(h + bnsh, 0.0).astype(jnp.bfloat16)

        # ---- aggregation: out[c,p] = sum_k w_k[c,p] * x[c, p + shift_k] ------
        acc = jnp.zeros((C, HWp), jnp.float32)
        for k in range(KK):                                    # static K*K tap loop
            dy, dx = divmod(k, K)
            s = (dy - padK) * width + (dx - padK)              # flat lane shift of tap k
            xs = x if s == 0 else pltpu.roll(x, (-s) % HWp, 1)  # xs[p] = x[p + s]
            # per-tap conv2 matmul, consumed immediately (no KK*C*HW scratch);
            # w2t_ref[k] / b2_ref[k] / mask_ref[k]: free first-axis static index.
            wk = jnp.dot(w2t_ref[k], h,
                         preferred_element_type=jnp.float32) + b2_ref[k]   # (C, HWp)
            acc = acc + xs * (wk * mask_ref[k])                # mask zeroes OOB / pad taps
        o_ref[i] = acc.astype(o_ref.dtype)
        return carry

    if BT <= 4:                     # tiny blocks: static unroll (LLO visibility)
        for i in range(BT):
            body(i, 0)
    else:                           # large blocks: bound live ranges / code size
        jax.lax.fori_loop(0, BT, body, 0)


# ----------------------------------------------------------------------------
# Parameter init (deterministic, synthetic)
# ----------------------------------------------------------------------------
def init_params(key, channels, kernel_size, reduct=2, groups=2):
    cr = channels // reduct
    kkg = kernel_size * kernel_size * groups
    k1, k2, k3, k4, k5 = jax.random.split(key, 5)
    return dict(
        w1=0.2 * jax.random.normal(k1, (channels, cr), jnp.float32),   # conv1 (bias=False, has BN)
        gamma=1.0 + 0.1 * jax.random.normal(k2, (cr,), jnp.float32),
        beta=0.1 * jax.random.normal(k3, (cr,), jnp.float32),
        mean=jnp.zeros((cr,), jnp.float32),                            # BN running stats (eval)
        var=jnp.ones((cr,), jnp.float32),
        w2=0.2 * jax.random.normal(k4, (cr, kkg), jnp.float32),        # conv2
        b2=0.1 * jax.random.normal(k5, (kkg,), jnp.float32),
    )


def _pick_batch_tile(B, per_image_bytes, max_block_bytes):
    """Largest batch tile that fits the block budget, keeps >=2 grid steps and
    (when possible) an even grid count so both v7x TensorCores get equal work."""
    bt = 1
    for cand in range(B, 0, -1):
        if B % cand:
            continue
        steps = B // cand
        if cand * per_image_bytes > max_block_bytes:
            continue
        if B >= 2 and steps < 2:
            continue
        if B >= 4 and steps % 2 != 0:
            continue
        bt = cand
        break
    return bt


def _nbytes(*arrs):
    return int(sum(int(a.size) * a.dtype.itemsize for a in arrs))


# ----------------------------------------------------------------------------
# Forward wrapper
# ----------------------------------------------------------------------------
def involution_forward(x, params, *, kernel_size, stride, groups, bn_eps=1e-5,
                       max_block_bytes=8 << 20):
    if stride != 1:
        # TODO(synk): stride>1 path (AvgPool2d on the weight branch + strided
        # unfold) is not wired into the Pallas kernel.
        raise NotImplementedError("stride > 1 not implemented in the Pallas path")

    B, C, H, W = x.shape
    K, G = kernel_size, groups
    KK = K * K
    Cg = C // G
    Cr = params["w1"].shape[1]
    Crp = ((Cr + 7) // 8) * 8             # pad reduced channels to a sublane multiple
    HW = H * W
    HWp = ((HW + 127) // 128) * 128       # lane-dense flattened spatial axis
    padK = (K - 1) // 2

    # ---- host-side parameter prep (tiny, done once) --------------------------
    bn_scale = params["gamma"] / jnp.sqrt(params["var"] + bn_eps)
    bn_shift = params["beta"] - params["mean"] * bn_scale
    # fold BN scale into conv1; zero-pad the reduced-channel axis to Crp
    w1t = jnp.zeros((Crp, C), jnp.float32).at[:Cr].set(
        (params["w1"] * bn_scale[None, :]).T).astype(jnp.bfloat16)
    bnsh = jnp.zeros((Crp, 1), jnp.float32).at[:Cr, 0].set(bn_shift)
    # expand conv2 so w2t[k, c, :] is output channel (c//Cg)*K*K + k:
    # the kernel then never needs a per-group sublane broadcast.
    col = ((jnp.arange(C) // Cg)[None, :] * KK
           + jnp.arange(KK)[:, None])                           # (KK, C)
    w2t = jnp.zeros((KK, C, Crp), jnp.float32).at[..., :Cr].set(
        params["w2"].T[col]).astype(jnp.bfloat16)
    b2 = params["b2"][col][..., None].astype(jnp.float32)       # (KK, C, 1)

    # ---- precomputed per-tap validity masks (incl. lane padding) -------------
    lane = jnp.arange(HWp, dtype=jnp.int32)
    yy, xx = lane // W, lane % W
    in_img = lane < HW
    taps = []
    for k in range(KK):
        dy, dx = divmod(k, K)
        oy, ox = dy - padK, dx - padK
        taps.append(in_img & (yy >= -oy) & (yy < H - oy) & (xx >= -ox) & (xx < W - ox))
    mask = jnp.stack(taps).astype(jnp.float32)[:, None, :]      # (KK, 1, HWp)

    # ---- input layout: (B, C, HWp), lane-dense ------------------------------
    xf = x.reshape(B, C, HW)
    if HWp != HW:
        xf = jnp.pad(xf, ((0, 0), (0, 0), (0, HWp - HW)))

    # ---- batch tiling + VMEM budget ------------------------------------------
    # TODO(synk): add channel tiling (second grid axis / in-kernel chunk loop)
    # for very large C where (C, HWp) f32 working sets exceed the vreg file.
    per_image_bytes = C * HWp * x.dtype.itemsize
    bt = _pick_batch_tile(B, per_image_bytes, max_block_bytes)
    grid = (B // bt,)

    block_bytes = bt * per_image_bytes
    const_bytes = _nbytes(w1t, bnsh, w2t, b2, mask)
    # 2x double-buffered input + 2x double-buffered output + constants + slack
    vmem_need = 4 * block_bytes + 2 * const_bytes + (1 << 20)
    vmem_limit = int(min(max(2 * vmem_need, 32 << 20), 48 << 20))

    flops = B * HW * (2 * Crp * C + KK * (2 * C * Crp + 3 * C))
    bytes_accessed = 2 * B * C * HWp * x.dtype.itemsize + const_bytes
    cost = pl.CostEstimate(flops=int(flops), transcendentals=0,
                           bytes_accessed=int(bytes_accessed))

    out = pl.pallas_call(
        functools.partial(_involution_fused_kernel, kernel_size=K, width=W),
        out_shape=jax.ShapeDtypeStruct((B, C, HWp), x.dtype),
        grid_spec=pltpu.PrefetchScalarGridSpec(
            num_scalar_prefetch=0,
            grid=grid,
            in_specs=[
                pl.BlockSpec((bt, C, HWp), lambda b: (b, 0, 0)),
                pl.BlockSpec((Crp, C), lambda b: (0, 0)),
                pl.BlockSpec((Crp, 1), lambda b: (0, 0)),
                pl.BlockSpec((KK, C, Crp), lambda b: (0, 0, 0)),
                pl.BlockSpec((KK, C, 1), lambda b: (0, 0, 0)),
                pl.BlockSpec((KK, 1, HWp), lambda b: (0, 0, 0)),
            ],
            out_specs=pl.BlockSpec((bt, C, HWp), lambda b: (b, 0, 0)),
        ),
        compiler_params=pltpu.CompilerParams(
            dimension_semantics=("parallel",),
            vmem_limit_bytes=vmem_limit),
        cost_estimate=cost,
    )(xf, w1t, bnsh, w2t, b2, mask)

    return out[:, :, :HW].reshape(B, C, H, W)


# ----------------------------------------------------------------------------
# Pure-JAX reference (mirrors the PyTorch forward, eval-mode BN, f32)
# ----------------------------------------------------------------------------
def reference_involution(x, params, *, kernel_size, stride, groups, bn_eps=1e-5):
    assert stride == 1
    B, C, H, W = x.shape
    K, G = kernel_size, groups
    Cg = C // G
    h1 = jnp.einsum("bchw,co->bohw", x, params["w1"])
    h1 = (h1 - params["mean"][None, :, None, None]) / jnp.sqrt(
        params["var"][None, :, None, None] + bn_eps)
    h1 = h1 * params["gamma"][None, :, None, None] + params["beta"][None, :, None, None]
    h1 = jnp.maximum(h1, 0.0)
    wgt = jnp.einsum("bchw,co->bohw", h1, params["w2"]) + params["b2"][None, :, None, None]
    wgt = wgt.reshape(B, G, K * K, H, W)[:, :, None]  # (B, G, 1, K*K, H, W)

    pad = (K - 1) // 2
    xp = jnp.pad(x, ((0, 0), (0, 0), (pad, pad), (pad, pad)))
    patches = jnp.stack(
        [xp[:, :, dy:dy + H, dx:dx + W] for dy in range(K) for dx in range(K)], axis=2
    )  # (B, C, K*K, H, W) -- same ordering as nn.Unfold
    patches = patches.reshape(B, G, Cg, K * K, H, W)
    return (wgt * patches).sum(axis=3).reshape(B, C, H, W)


if __name__ == "__main__":
    B, C, H, W = 2, 8, 16, 16
    K, STRIDE, REDUCT, GROUPS = 3, 1, 2, 2

    key = jax.random.PRNGKey(0)
    kx, kp = jax.random.split(key)
    x = jax.random.normal(kx, (B, C, H, W), jnp.float32)
    params = init_params(kp, C, K, reduct=REDUCT, groups=GROUPS)

    out = involution_forward(x, params, kernel_size=K, stride=STRIDE, groups=GROUPS)
    out = jax.block_until_ready(out)
    assert out.shape == (B, C, H, W)

    ref = reference_involution(x, params, kernel_size=K, stride=STRIDE, groups=GROUPS)
    np.testing.assert_allclose(np.asarray(out), np.asarray(ref), rtol=2e-2, atol=2e-2)

    print("KERNEL_OK")
</pallas_src>

<mosaic_0001>
module attributes {stable_mosaic.version = 11 : i64} {
  func.func @_involution_fused_kernel(%arg0: i32, %arg1: memref<1x8x256xf32, #tpu.memory_space<vmem>>, %arg2: memref<8x8xbf16, #tpu.memory_space<vmem>>, %arg3: memref<8x1xf32, #tpu.memory_space<vmem>>, %arg4: memref<9x8x8xbf16, #tpu.memory_space<vmem>>, %arg5: memref<9x8x1xf32, #tpu.memory_space<vmem>>, %arg6: memref<9x1x256xf32, #tpu.memory_space<vmem>>, %arg7: memref<1x8x256xf32, #tpu.memory_space<vmem>>) attributes {dimension_semantics = [#tpu.dimension_semantics<parallel>], iteration_bounds = array<i64: 2>, scalar_prefetch = 0 : i64, scratch_operands = 0 : i64, tpu.core_type = #tpu.core_type<tc>, window_params = [{transform_indices = @transform_0, window_bounds = array<i64: 1, 8, 256>}, {pipeline_mode = #tpu.pipeline_mode<synchronous>, transform_indices = @transform_1, window_bounds = array<i64: 8, 8>}, {pipeline_mode = #tpu.pipeline_mode<synchronous>, transform_indices = @transform_2, window_bounds = array<i64: 8, 1>}, {pipeline_mode = #tpu.pipeline_mode<synchronous>, transform_indices = @transform_3, window_bounds = array<i64: 9, 8, 8>}, {pipeline_mode = #tpu.pipeline_mode<synchronous>, transform_indices = @transform_4, window_bounds = array<i64: 9, 8, 1>}, {pipeline_mode = #tpu.pipeline_mode<synchronous>, transform_indices = @transform_5, window_bounds = array<i64: 9, 1, 256>}, {transform_indices = @transform_6, window_bounds = array<i64: 1, 8, 256>}]} {
    %c0 = arith.constant 0 : index
    %c0_0 = arith.constant 0 : index
    %0 = vector.load %arg2[%c0, %c0_0] : memref<8x8xbf16, #tpu.memory_space<vmem>>, vector<8x8xbf16>
    %c0_1 = arith.constant 0 : index
    %c0_2 = arith.constant 0 : index
    %1 = vector.load %arg3[%c0_1, %c0_2] : memref<8x1xf32, #tpu.memory_space<vmem>>, vector<8x1xf32>
    %c0_3 = arith.constant 0 : index
    %c0_4 = arith.constant 0 : index
    %c0_5 = arith.constant 0 : index
    %2 = vector.load %arg1[%c0_3, %c0_4, %c0_5] : memref<1x8x256xf32, #tpu.memory_space<vmem>>, vector<1x8x256xf32>
    %3 = vector.shape_cast %2 : vector<1x8x256xf32> to vector<8x256xf32>
    %4 = arith.truncf %3 : vector<8x256xf32> to vector<8x256xbf16>
    %cst = arith.constant dense<0.000000e+00> : vector<8x256xf32>
    %5 = tpu.matmul %0, %4, %cst {dimension_numbers = #tpu.dot_dimension_numbers<[1], [0], [0], [1], [0, 0, 1, 1], [], []>} : vector<8x8xbf16>, vector<8x256xbf16>, vector<8x256xf32> -> vector<8x256xf32>
    %6 = vector.broadcast %1 : vector<8x1xf32> to vector<8x256xf32>
    %7 = arith.addf %5, %6 : vector<8x256xf32>
    %cst_6 = arith.constant 0.000000e+00 : f32
    %8 = vector.broadcast %cst_6 : f32 to vector<8x256xf32>
    %9 = arith.maximumf %7, %8 : vector<8x256xf32>
    %10 = arith.truncf %9 : vector<8x256xf32> to vector<8x256xbf16>
    %cst_7 = arith.constant 0.000000e+00 : f32
    %11 = vector.broadcast %cst_7 : f32 to vector<8x256xf32>
    %c17_i32 = arith.constant 17 : i32
    %12 = tpu.dynamic_rotate %3 by %c17_i32 dim 1 : vector<8x256xf32>, i32 -> vector<8x256xf32>
    %c0_8 = arith.constant 0 : index
    %c0_9 = arith.constant 0 : index
    %c0_10 = arith.constant 0 : index
    %13 = vector.load %arg4[%c0_8, %c0_9, %c0_10] : memref<9x8x8xbf16, #tpu.memory_space<vmem>>, vector<1x8x8xbf16>
    %14 = vector.shape_cast %13 : vector<1x8x8xbf16> to vector<8x8xbf16>
    %cst_11 = arith.constant dense<0.000000e+00> : vector<8x256xf32>
    %15 = tpu.matmul %14, %10, %cst_11 {dimension_numbers = #tpu.dot_dimension_numbers<[1], [0], [0], [1], [0, 0, 1, 1], [], []>} : vector<8x8xbf16>, vector<8x256xbf16>, vector<8x256xf32> -> vector<8x256xf32>
    %c0_12 = arith.constant 0 : index
    %c0_13 = arith.constant 0 : index
    %c0_14 = arith.constant 0 : index
    %16 = vector.load %arg5[%c0_12, %c0_13, %c0_14] : memref<9x8x1xf32, #tpu.memory_space<vmem>>, vector<1x8x1xf32>
    %17 = vector.shape_cast %16 : vector<1x8x1xf32> to vector<8x1xf32>
    %18 = vector.broadcast %17 : vector<8x1xf32> to vector<8x256xf32>
    %19 = arith.addf %15, %18 : vector<8x256xf32>
    %c0_15 = arith.constant 0 : index
    %c0_16 = arith.constant 0 : index
    %c0_17 = arith.constant 0 : index
    %20 = vector.load %arg6[%c0_15, %c0_16, %c0_17] : memref<9x1x256xf32, #tpu.memory_space<vmem>>, vector<1x1x256xf32>
    %21 = vector.shape_cast %20 : vector<1x1x256xf32> to vector<1x256xf32>
    %22 = vector.broadcast %21 : vector<1x256xf32> to vector<8x256xf32>
    %23 = arith.mulf %19, %22 : vector<8x256xf32>
    %24 = arith.mulf %12, %23 : vector<8x256xf32>
    %25 = arith.addf %11, %24 : vector<8x256xf32>
    %c16_i32 = arith.constant 16 : i32
    %26 = tpu.dynamic_rotate %3 by %c16_i32 dim 1 : vector<8x256xf32>, i32 -> vector<8x256xf32>
    %c1 = arith.constant 1 : index
    %c0_18 = arith.constant 0 : index
    %c0_19 = arith.constant 0 : index
    %27 = vector.load %arg4[%c1, %c0_18, %c0_19] : memref<9x8x8xbf16, #tpu.memory_space<vmem>>, vector<1x8x8xbf16>
    %28 = vector.shape_cast %27 : vector<1x8x8xbf16> to vector<8x8xbf16>
    %cst_20 = arith.constant dense<0.000000e+00> : vector<8x256xf32>
    %29 = tpu.matmul %28, %10, %cst_20 {dimension_numbers = #tpu.dot_dimension_numbers<[1], [0], [0], [1], [0, 0, 1, 1], [], []>} : vector<8x8xbf16>, vector<8x256xbf16>, vector<8x256xf32> -> vector<8x256xf32>
    %c1_21 = arith.constant 1 : index
    %c0_22 = arith.constant 0 : index
    %c0_23 = arith.constant 0 : index
    %30 = vector.load %arg5[%c1_21, %c0_22, %c0_23] : memref<9x8x1xf32, #tpu.memory_space<vmem>>, vector<1x8x1xf32>
    %31 = vector.shape_cast %30 : vector<1x8x1xf32> to vector<8x1xf32>
    %32 = vector.broadcast %31 : vector<8x1xf32> to vector<8x256xf32>
    %33 = arith.addf %29, %32 : vector<8x256xf32>
    %c1_24 = arith.constant 1 : index
    %c0_25 = arith.constant 0 : index
    %c0_26 = arith.constant 0 : index
    %34 = vector.load %arg6[%c1_24, %c0_25, %c0_26] : memref<9x1x256xf32, #tpu.memory_space<vmem>>, vector<1x1x256xf32>
    %35 = vector.shape_cast %34 : vector<1x1x256xf32> to vector<1x256xf32>
    %36 = vector.broadcast %35 : vector<1x256xf32> to vector<8x256xf32>
    %37 = arith.mulf %33, %36 : vector<8x256xf32>
    %38 = arith.mulf %26, %37 : vector<8x256xf32>
    %39 = arith.addf %25, %38 : vector<8x256xf32>
    %c15_i32 = arith.constant 15 : i32
    %40 = tpu.dynamic_rotate %3 by %c15_i32 dim 1 : vector<8x256xf32>, i32 -> vector<8x256xf32>
    %c2 = arith.constant 2 : index
    %c0_27 = arith.constant 0 : index
    %c0_28 = arith.constant 0 : index
    %41 = vector.load %arg4[%c2, %c0_27, %c0_28] : memref<9x8x8xbf16, #tpu.memory_space<vmem>>, vector<1x8x8xbf16>
    %42 = vector.shape_cast %41 : vector<1x8x8xbf16> to vector<8x8xbf16>
    %cst_29 = arith.constant dense<0.000000e+00> : vector<8x256xf32>
    %43 = tpu.matmul %42, %10, %cst_29 {dimension_numbers = #tpu.dot_dimension_numbers<[1], [0], [0], [1], [0, 0, 1, 1], [], []>} : vector<8x8xbf16>, vector<8x256xbf16>, vector<8x256xf32> -> vector<8x256xf32>
    %c2_30 = arith.constant 2 : index
    %c0_31 = arith.constant 0 : index
    %c0_32 = arith.constant 0 : index
    %44 = vector.load %arg5[%c2_30, %c0_31, %c0_32] : memref<9x8x1xf32, #tpu.memory_space<vmem>>, vector<1x8x1xf32>
    %45 = vector.shape_cast %44 : vector<1x8x1xf32> to vector<8x1xf32>
    %46 = vector.broadcast %45 : vector<8x1xf32> to vector<8x256xf32>
    %47 = arith.addf %43, %46 : vector<8x256xf32>
    %c2_33 = arith.constant 2 : index
    %c0_34 = arith.constant 0 : index
    %c0_35 = arith.constant 0 : index
    %48 = vector.load %arg6[%c2_33, %c0_34, %c0_35] : memref<9x1x256xf32, #tpu.memory_space<vmem>>, vector<1x1x256xf32>
    %49 = vector.shape_cast %48 : vector<1x1x256xf32> to vector<1x256xf32>
    %50 = vector.broadcast %49 : vector<1x256xf32> to vector<8x256xf32>
    %51 = arith.mulf %47, %50 : vector<8x256xf32>
    %52 = arith.mulf %40, %51 : vector<8x256xf32>
    %53 = arith.addf %39, %52 : vector<8x256xf32>
    %c1_i32 = arith.constant 1 : i32
    %54 = tpu.dynamic_rotate %3 by %c1_i32 dim 1 : vector<8x256xf32>, i32 -> vector<8x256xf32>
    %c3 = arith.constant 3 : index
    %c0_36 = arith.constant 0 : index
    %c0_37 = arith.constant 0 : index
    %55 = vector.load %arg4[%c3, %c0_36, %c0_37] : memref<9x8x8xbf16, #tpu.memory_space<vmem>>, vector<1x8x8xbf16>
    %56 = vector.shape_cast %55 : vector<1x8x8xbf16> to vector<8x8xbf16>
    %cst_38 = arith.constant dense<0.000000e+00> : vector<8x256xf32>
    %57 = tpu.matmul %56, %10, %cst_38 {dimension_numbers = #tpu.dot_dimension_numbers<[1], [0], [0], [1], [0, 0, 1, 1], [], []>} : vector<8x8xbf16>, vector<8x256xbf16>, vector<8x256xf32> -> vector<8x256xf32>
    %c3_39 = arith.constant 3 : index
    %c0_40 = arith.constant 0 : index
    %c0_41 = arith.constant 0 : index
    %58 = vector.load %arg5[%c3_39, %c0_40, %c0_41] : memref<9x8x1xf32, #tpu.memory_space<vmem>>, vector<1x8x1xf32>
    %59 = vector.shape_cast %58 : vector<1x8x1xf32> to vector<8x1xf32>
    %60 = vector.broadcast %59 : vector<8x1xf32> to vector<8x256xf32>
    %61 = arith.addf %57, %60 : vector<8x256xf32>
    %c3_42 = arith.constant 3 : index
    %c0_43 = arith.constant 0 : index
    %c0_44 = arith.constant 0 : index
    %62 = vector.load %arg6[%c3_42, %c0_43, %c0_44] : memref<9x1x256xf32, #tpu.memory_space<vmem>>, vector<1x1x256xf32>
    %63 = vector.shape_cast %62 : vector<1x1x256xf32> to vector<1x256xf32>
    %64 = vector.broadcast %63 : vector<1x256xf32> to vector<8x256xf32>
    %65 = arith.mulf %61, %64 : vector<8x256xf32>
    %66 = arith.mulf %54, %65 : vector<8x256xf32>
    %67 = arith.addf %53, %66 : vector<8x256xf32>
    %c4 = arith.constant 4 : index
    %c0_45 = arith.constant 0 : index
    %c0_46 = arith.constant 0 : index
    %68 = vector.load %arg4[%c4, %c0_45, %c0_46] : memref<9x8x8xbf16, #tpu.memory_space<vmem>>, vector<1x8x8xbf16>
    %69 = vector.shape_cast %68 : vector<1x8x8xbf16> to vector<8x8xbf16>
    %cst_47 = arith.constant dense<0.000000e+00> : vector<8x256xf32>
    %70 = tpu.matmul %69, %10, %cst_47 {dimension_numbers = #tpu.dot_dimension_numbers<[1], [0], [0], [1], [0, 0, 1, 1], [], []>} : vector<8x8xbf16>, vector<8x256xbf16>, vector<8x256xf32> -> vector<8x256xf32>
    %c4_48 = arith.constant 4 : index
    %c0_49 = arith.constant 0 : index
    %c0_50 = arith.constant 0 : index
    %71 = vector.load %arg5[%c4_48, %c0_49, %c0_50] : memref<9x8x1xf32, #tpu.memory_space<vmem>>, vector<1x8x1xf32>
    %72 = vector.shape_cast %71 : vector<1x8x1xf32> to vector<8x1xf32>
    %73 = vector.broadcast %72 : vector<8x1xf32> to vector<8x256xf32>
    %74 = arith.addf %70, %73 : vector<8x256xf32>
    %c4_51 = arith.constant 4 : index
    %c0_52 = arith.constant 0 : index
    %c0_53 = arith.constant 0 : index
    %75 = vector.load %arg6[%c4_51, %c0_52, %c0_53] : memref<9x1x256xf32, #tpu.memory_space<vmem>>, vector<1x1x256xf32>
    %76 = vector.shape_cast %75 : vector<1x1x256xf32> to vector<1x256xf32>
    %77 = vector.broadcast %76 : vector<1x256xf32> to vector<8x256xf32>
    %78 = arith.mulf %74, %77 : vector<8x256xf32>
    %79 = arith.mulf %3, %78 : vector<8x256xf32>
    %80 = arith.addf %67, %79 : vector<8x256xf32>
    %c255_i32 = arith.constant 255 : i32
    %81 = tpu.dynamic_rotate %3 by %c255_i32 dim 1 : vector<8x256xf32>, i32 -> vector<8x256xf32>
    %c5 = arith.constant 5 : index
    %c0_54 = arith.constant 0 : index
    %c0_55 = arith.constant 0 : index
    %82 = vector.load %arg4[%c5, %c0_54, %c0_55] : memref<9x8x8xbf16, #tpu.memory_space<vmem>>, vector<1x8x8xbf16>
    %83 = vector.shape_cast %82 : vector<1x8x8xbf16> to vector<8x8xbf16>
    %cst_56 = arith.constant dense<0.000000e+00> : vector<8x256xf32>
    %84 = tpu.matmul %83, %10, %cst_56 {dimension_numbers = #tpu.dot_dimension_numbers<[1], [0], [0], [1], [0, 0, 1, 1], [], []>} : vector<8x8xbf16>, vector<8x256xbf16>, vector<8x256xf32> -> vector<8x256xf32>
    %c5_57 = arith.constant 5 : index
    %c0_58 = arith.constant 0 : index
    %c0_59 = arith.constant 0 : index
    %85 = vector.load %arg5[%c5_57, %c0_58, %c0_59] : memref<9x8x1xf32, #tpu.memory_space<vmem>>, vector<1x8x1xf32>
    %86 = vector.shape_cast %85 : vector<1x8x1xf32> to vector<8x1xf32>
    %87 = vector.broadcast %86 : vector<8x1xf32> to vector<8x256xf32>
    %88 = arith.addf %84, %87 : vector<8x256xf32>
    %c5_60 = arith.constant 5 : index
    %c0_61 = arith.constant 0 : index
    %c0_62 = arith.constant 0 : index
    %89 = vector.load %arg6[%c5_60, %c0_61, %c0_62] : memref<9x1x256xf32, #tpu.memory_space<vmem>>, vector<1x1x256xf32>
    %90 = vector.shape_cast %89 : vector<1x1x256xf32> to vector<1x256xf32>
    %91 = vector.broadcast %90 : vector<1x256xf32> to vector<8x256xf32>
    %92 = arith.mulf %88, %91 : vector<8x256xf32>
    %93 = arith.mulf %81, %92 : vector<8x256xf32>
    %94 = arith.addf %80, %93 : vector<8x256xf32>
    %c241_i32 = arith.constant 241 : i32
    %95 = tpu.dynamic_rotate %3 by %c241_i32 dim 1 : vector<8x256xf32>, i32 -> vector<8x256xf32>
    %c6 = arith.constant 6 : index
    %c0_63 = arith.constant 0 : index
    %c0_64 = arith.constant 0 : index
    %96 = vector.load %arg4[%c6, %c0_63, %c0_64] : memref<9x8x8xbf16, #tpu.memory_space<vmem>>, vector<1x8x8xbf16>
    %97 = vector.shape_cast %96 : vector<1x8x8xbf16> to vector<8x8xbf16>
    %cst_65 = arith.constant dense<0.000000e+00> : vector<8x256xf32>
    %98 = tpu.matmul %97, %10, %cst_65 {dimension_numbers = #tpu.dot_dimension_numbers<[1], [0], [0], [1], [0, 0, 1, 1], [], []>} : vector<8x8xbf16>, vector<8x256xbf16>, vector<8x256xf32> -> vector<8x256xf32>
    %c6_66 = arith.constant 6 : index
    %c0_67 = arith.constant 0 : index
    %c0_68 = arith.constant 0 : index
    %99 = vector.load %arg5[%c6_66, %c0_67, %c0_68] : memref<9x8x1xf32, #tpu.memory_space<vmem>>, vector<1x8x1xf32>
    %100 = vector.shape_cast %99 : vector<1x8x1xf32> to vector<8x1xf32>
    %101 = vector.broadcast %100 : vector<8x1xf32> to vector<8x256xf32>
    %102 = arith.addf %98, %101 : vector<8x256xf32>
    %c6_69 = arith.constant 6 : index
    %c0_70 = arith.constant 0 : index
    %c0_71 = arith.constant 0 : index
    %103 = vector.load %arg6[%c6_69, %c0_70, %c0_71] : memref<9x1x256xf32, #tpu.memory_space<vmem>>, vector<1x1x256xf32>
    %104 = vector.shape_cast %103 : vector<1x1x256xf32> to vector<1x256xf32>
    %105 = vector.broadcast %104 : vector<1x256xf32> to vector<8x256xf32>
    %106 = arith.mulf %102, %105 : vector<8x256xf32>
    %107 = arith.mulf %95, %106 : vector<8x256xf32>
    %108 = arith.addf %94, %107 : vector<8x256xf32>
    %c240_i32 = arith.constant 240 : i32
    %109 = tpu.dynamic_rotate %3 by %c240_i32 dim 1 : vector<8x256xf32>, i32 -> vector<8x256xf32>
    %c7 = arith.constant 7 : index
    %c0_72 = arith.constant 0 : index
    %c0_73 = arith.constant 0 : index
    %110 = vector.load %arg4[%c7, %c0_72, %c0_73] : memref<9x8x8xbf16, #tpu.memory_space<vmem>>, vector<1x8x8xbf16>
    %111 = vector.shape_cast %110 : vector<1x8x8xbf16> to vector<8x8xbf16>
    %cst_74 = arith.constant dense<0.000000e+00> : vector<8x256xf32>
    %112 = tpu.matmul %111, %10, %cst_74 {dimension_numbers = #tpu.dot_dimension_numbers<[1], [0], [0], [1], [0, 0, 1, 1], [], []>} : vector<8x8xbf16>, vector<8x256xbf16>, vector<8x256xf32> -> vector<8x256xf32>
    %c7_75 = arith.constant 7 : index
    %c0_76 = arith.constant 0 : index
    %c0_77 = arith.constant 0 : index
    %113 = vector.load %arg5[%c7_75, %c0_76, %c0_77] : memref<9x8x1xf32, #tpu.memory_space<vmem>>, vector<1x8x1xf32>
    %114 = vector.shape_cast %113 : vector<1x8x1xf32> to vector<8x1xf32>
    %115 = vector.broadcast %114 : vector<8x1xf32> to vector<8x256xf32>
    %116 = arith.addf %112, %115 : vector<8x256xf32>
    %c7_78 = arith.constant 7 : index
    %c0_79 = arith.constant 0 : index
    %c0_80 = arith.constant 0 : index
    %117 = vector.load %arg6[%c7_78, %c0_79, %c0_80] : memref<9x1x256xf32, #tpu.memory_space<vmem>>, vector<1x1x256xf32>
    %118 = vector.shape_cast %117 : vector<1x1x256xf32> to vector<1x256xf32>
    %119 = vector.broadcast %118 : vector<1x256xf32> to vector<8x256xf32>
    %120 = arith.mulf %116, %119 : vector<8x256xf32>
    %121 = arith.mulf %109, %120 : vector<8x256xf32>
    %122 = arith.addf %108, %121 : vector<8x256xf32>
    %c239_i32 = arith.constant 239 : i32
    %123 = tpu.dynamic_rotate %3 by %c239_i32 dim 1 : vector<8x256xf32>, i32 -> vector<8x256xf32>
    %c8 = arith.constant 8 : index
    %c0_81 = arith.constant 0 : index
    %c0_82 = arith.constant 0 : index
    %124 = vector.load %arg4[%c8, %c0_81, %c0_82] : memref<9x8x8xbf16, #tpu.memory_space<vmem>>, vector<1x8x8xbf16>
    %125 = vector.shape_cast %124 : vector<1x8x8xbf16> to vector<8x8xbf16>
    %cst_83 = arith.constant dense<0.000000e+00> : vector<8x256xf32>
    %126 = tpu.matmul %125, %10, %cst_83 {dimension_numbers = #tpu.dot_dimension_numbers<[1], [0], [0], [1], [0, 0, 1, 1], [], []>} : vector<8x8xbf16>, vector<8x256xbf16>, vector<8x256xf32> -> vector<8x256xf32>
    %c8_84 = arith.constant 8 : index
    %c0_85 = arith.constant 0 : index
    %c0_86 = arith.constant 0 : index
    %127 = vector.load %arg5[%c8_84, %c0_85, %c0_86] : memref<9x8x1xf32, #tpu.memory_space<vmem>>, vector<1x8x1xf32>
    %128 = vector.shape_cast %127 : vector<1x8x1xf32> to vector<8x1xf32>
    %129 = vector.broadcast %128 : vector<8x1xf32> to vector<8x256xf32>
    %130 = arith.addf %126, %129 : vector<8x256xf32>
    %c8_87 = arith.constant 8 : index
    %c0_88 = arith.constant 0 : index
    %c0_89 = arith.constant 0 : index
    %131 = vector.load %arg6[%c8_87, %c0_88, %c0_89] : memref<9x1x256xf32, #tpu.memory_space<vmem>>, vector<1x1x256xf32>
    %132 = vector.shape_cast %131 : vector<1x1x256xf32> to vector<1x256xf32>
    %133 = vector.broadcast %132 : vector<1x256xf32> to vector<8x256xf32>
    %134 = arith.mulf %130, %133 : vector<8x256xf32>
    %135 = arith.mulf %123, %134 : vector<8x256xf32>
    %136 = arith.addf %122, %135 : vector<8x256xf32>
    %c0_90 = arith.constant 0 : index
    %c0_91 = arith.constant 0 : index
    %c0_92 = arith.constant 0 : index
    %137 = vector.load %arg7[%c0_90, %c0_91, %c0_92] : memref<1x8x256xf32, #tpu.memory_space<vmem>>, vector<1x8x256xf32>
    %138 = vector.shape_cast %137 : vector<1x8x256xf32> to vector<8x256xf32>
    %139 = vector.shape_cast %136 : vector<8x256xf32> to vector<1x8x256xf32>
    tpu.vector_store %arg7[%c0_90, %c0_91, %c0_92], %139 {strides = array<i32>} : memref<1x8x256xf32, #tpu.memory_space<vmem>>, vector<1x8x256xf32>,
    return
  }
  func.func @transform_0(%arg0: i32) -> (i32, i32, i32) {
    %c0_i32 = arith.constant 0 : i32
    %c0_i32_0 = arith.constant 0 : i32
    %c0_i32_1 = arith.constant 0 : i32
    return %arg0, %c0_i32, %c0_i32_0 : i32, i32, i32
  }
  func.func @transform_1(%arg0: i32) -> (i32, i32) {
    %c0_i32 = arith.constant 0 : i32
    %c0_i32_0 = arith.constant 0 : i32
    %c0_i32_1 = arith.constant 0 : i32
    return %c0_i32, %c0_i32_0 : i32, i32
  }
  func.func @transform_2(%arg0: i32) -> (i32, i32) {
    %c0_i32 = arith.constant 0 : i32
    %c0_i32_0 = arith.constant 0 : i32
    %c0_i32_1 = arith.constant 0 : i32
    return %c0_i32, %c0_i32_0 : i32, i32
  }
  func.func @transform_3(%arg0: i32) -> (i32, i32, i32) {
    %c0_i32 = arith.constant 0 : i32
    %c0_i32_0 = arith.constant 0 : i32
    %c0_i32_1 = arith.constant 0 : i32
    %c0_i32_2 = arith.constant 0 : i32
    return %c0_i32, %c0_i32_0, %c0_i32_1 : i32, i32, i32
  }
  func.func @transform_4(%arg0: i32) -> (i32, i32, i32) {
    %c0_i32 = arith.constant 0 : i32
    %c0_i32_0 = arith.constant 0 : i32
    %c0_i32_1 = arith.constant 0 : i32
    %c0_i32_2 = arith.constant 0 : i32
    return %c0_i32, %c0_i32_0, %c0_i32_1 : i32, i32, i32
  }
  func.func @transform_5(%arg0: i32) -> (i32, i32, i32) {
    %c0_i32 = arith.constant 0 : i32
    %c0_i32_0 = arith.constant 0 : i32
    %c0_i32_1 = arith.constant 0 : i32
    %c0_i32_2 = arith.constant 0 : i32
    return %c0_i32, %c0_i32_0, %c0_i32_1 : i32, i32, i32
  }
  func.func @transform_6(%arg0: i32) -> (i32, i32, i32) {
    %c0_i32 = arith.constant 0 : i32
    %c0_i32_0 = arith.constant 0 : i32
    %c0_i32_1 = arith.constant 0 : i32
    return %arg0, %c0_i32, %c0_i32_0 : i32, i32, i32
  }
}

</mosaic_0001>

<llo_original>
// kernel: tpu_custom_call.1
$region0: #{tpu_custom_call.1}
  #allocation0 [shape = 'u32[]', space=smem, size = 0x4, offset = 0x4, fixed_abs, tag = 'smem constant byte address 0x4 - core index']
  #allocation1 [shape = 'u32[144,128]{1,0:T(1,128)}', space=vmem, size = 0x12000, scoped, tag = 'internal scratch']
  %s0 = inlined_call_operand.vmem [shape: f32[2,8,256], index: 0, kind: input, shape index: {}]
  %s1 = inlined_call_operand.vmem [shape: bf16[8,8], index: 1, kind: input, shape index: {}]
  %s2 = inlined_call_operand.vmem [shape: f32[8,1], index: 2, kind: input, shape index: {}]
  %s3 = inlined_call_operand.vmem [shape: bf16[9,8,8], index: 3, kind: input, shape index: {}]
  %s4 = inlined_call_operand.vmem [shape: f32[9,8,1], index: 4, kind: input, shape index: {}]
  %s5 = inlined_call_operand.vmem [shape: f32[9,1,256], index: 5, kind: input, shape index: {}]
  %s6 = inlined_call_operand.hbm [shape: f32[2,8,256], index: 6, kind: output, shape index: {}]
  %s7 = sld [smem:[#allocation0]]
  $region57: #{tpu_custom_call.1} parent=0
    _
  %s9 = ssub.s32 1, %s7
  %s10 = scalar_select 0, %s9, %s7
  $region1: #{tpu_custom_call.1} parent=0
    #allocation2 [shape = 'u8[16384]{0}', space=vmem, size = 0x4000, scoped, tag = 'output window, operand 0']
    #allocation3 [shape = 's32[2]{0}', space=sflag, size = 0x8, scoped, tag = 'scoped memory for tpu_custom_call.1']
    %11 = vsyncpa [#allocation3], 0
    %s12 = scalar_lea.sflag [#allocation3], 1
    %13 = vsyncpa %s12, 0
    loop: start=0, step=1, limit=4
    $region2: #{tpu_custom_call.1} parent=1 // loop_pre_header
      _
    $region3: #{tpu_custom_call.1} parent=1 // loop_header
      %s15 = sphi 0, %s19
      %p16 = scmp.ge.s32.totalorder %s15, 4
      %s25 = sphi 0, %s27
      %s28 = sphi 0, %s25
      %s29 = sphi 0, %s28
      %s45 = sphi 0, %s29
      %s49 = sphi 0, %s49
      %s51 = sphi 0, %s49
      %s52 = sphi 0, %s51
      %s66 = sphi 0, %s52
      %s70 = sphi 0, %s70
      %s72 = sphi 0, %s70
      %s73 = sphi 0, %s72
      %s87 = sphi 0, %s73
      %s91 = sphi 0, %s91
      %s93 = sphi 0, %s91
      %s94 = sphi 0, %s93
      %s108 = sphi 0, %s94
      %s112 = sphi 0, %s112
      %s114 = sphi 0, %s112
      %s115 = sphi 0, %s114
      %s129 = sphi 0, %s115
      %s133 = sphi 0, %s133
      %s135 = sphi 0, %s133
      %s136 = sphi 0, %s135
      %s150 = sphi 0, %s136
      %s156 = sphi 0, %s158
      %s159 = sphi 0, %s156
      %s160 = sphi 0, %s159
      %s176 = sphi 0, %s160
    $region4: #{tpu_custom_call.1} parent=1 // loop_header_branch
      %18 = sbr.rel (%p16) target = $region8
    $region5: #{tpu_custom_call.1} parent=1 // loop_body
      %s20 = ssub.s32 %s15, 1
      %s21 = ssub.s32 %s15, 2
      %s22 = sadd.s32 %s15, 1
      %s23 = ssub.s32 %s15, %s22
      %p24 = scmp.eq.s32.totalorder %s23, 0
      %s26 = sadd.s32 %s25, 1
      %s27 = scalar_select %p24, %s25, %s26
      %p30 = pneg %p24
      %p31 = scmp.eq.s32.totalorder %s15, 1
      %p32 = por %p30, %p31
      %p33 = scmp.ne.s32.totalorder %s25, %s28
      %p34 = scmp.eq.s32.totalorder %s15, 0
      %p35 = por %p33, %p34
      %p36 = scmp.ne.s32.totalorder %s25, %s28
      %p37 = scmp.eq.s32.totalorder %s20, 1
      %p38 = por %p36, %p37
      %p39 = scmp.ne.s32.totalorder %s28, %s29
      %p40 = scmp.eq.s32.totalorder %s20, 0
      %p41 = por %p39, %p40
      %p42 = scmp.ne.s32.totalorder %s28, %s29
      %p43 = scmp.eq.s32.totalorder %s21, 1
      %p44 = por %p42, %p43
      %p46 = scmp.ne.s32.totalorder %s29, %s45
      %p47 = scmp.eq.s32.totalorder %s21, 0
      %p48 = por %p46, %p47
      %s50 = sadd.s32 %s49, 1
      %p53 = scmp.eq.s32.totalorder %s15, 1
      %p54 = scmp.ne.s32.totalorder %s49, %s51
      %p55 = scmp.eq.s32.totalorder %s15, 0
      %p56 = por %p54, %p55
      %p57 = scmp.ne.s32.totalorder %s49, %s51
      %p58 = scmp.eq.s32.totalorder %s20, 1
      %p59 = por %p57, %p58
      %p60 = scmp.ne.s32.totalorder %s51, %s52
      %p61 = scmp.eq.s32.totalorder %s20, 0
      %p62 = por %p60, %p61
      %p63 = scmp.ne.s32.totalorder %s51, %s52
      %p64 = scmp.eq.s32.totalorder %s21, 1
      %p65 = por %p63, %p64
      %p67 = scmp.ne.s32.totalorder %s52, %s66
      %p68 = scmp.eq.s32.totalorder %s21, 0
      %p69 = por %p67, %p68
      %s71 = sadd.s32 %s70, 1
      %p74 = scmp.eq.s32.totalorder %s15, 1
      %p75 = scmp.ne.s32.totalorder %s70, %s72
      %p76 = scmp.eq.s32.totalorder %s15, 0
      %p77 = por %p75, %p76
      %p78 = scmp.ne.s32.totalorder %s70, %s72
      %p79 = scmp.eq.s32.totalorder %s20, 1
      %p80 = por %p78, %p79
      %p81 = scmp.ne.s32.totalorder %s72, %s73
      %p82 = scmp.eq.s32.totalorder %s20, 0
      %p83 = por %p81, %p82
      %p84 = scmp.ne.s32.totalorder %s72, %s73
      %p85 = scmp.eq.s32.totalorder %s21, 1
      %p86 = por %p84, %p85
      %p88 = scmp.ne.s32.totalorder %s73, %s87
      %p89 = scmp.eq.s32.totalorder %s21, 0
      %p90 = por %p88, %p89
      %s92 = sadd.s32 %s91, 1
      %p95 = scmp.eq.s32.totalorder %s15, 1
      %p96 = scmp.ne.s32.totalorder %s91, %s93
      %p97 = scmp.eq.s32.totalorder %s15, 0
      %p98 = por %p96, %p97
      %p99 = scmp.ne.s32.totalorder %s91, %s93
      %p100 = scmp.eq.s32.totalorder %s20, 1
      %p101 = por %p99, %p100
      %p102 = scmp.ne.s32.totalorder %s93, %s94
      %p103 = scmp.eq.s32.totalorder %s20, 0
      %p104 = por %p102, %p103
      %p105 = scmp.ne.s32.totalorder %s93, %s94
      %p106 = scmp.eq.s32.totalorder %s21, 1
      %p107 = por %p105, %p106
      %p109 = scmp.ne.s32.totalorder %s94, %s108
      %p110 = scmp.eq.s32.totalorder %s21, 0
      %p111 = por %p109, %p110
      %s113 = sadd.s32 %s112, 1
      %p116 = scmp.eq.s32.totalorder %s15, 1
      %p117 = scmp.ne.s32.totalorder %s112, %s114
      %p118 = scmp.eq.s32.totalorder %s15, 0
      %p119 = por %p117, %p118
      %p120 = scmp.ne.s32.totalorder %s112, %s114
      %p121 = scmp.eq.s32.totalorder %s20, 1
      %p122 = por %p120, %p121
      %p123 = scmp.ne.s32.totalorder %s114, %s115
      %p124 = scmp.eq.s32.totalorder %s20, 0
      %p125 = por %p123, %p124
      %p126 = scmp.ne.s32.totalorder %s114, %s115
      %p127 = scmp.eq.s32.totalorder %s21, 1
      %p128 = por %p126, %p127
      %p130 = scmp.ne.s32.totalorder %s115, %s129
      %p131 = scmp.eq.s32.totalorder %s21, 0
      %p132 = por %p130, %p131
      %s134 = sadd.s32 %s133, 1
      %p137 = scmp.eq.s32.totalorder %s15, 1
      %p138 = scmp.ne.s32.totalorder %s133, %s135
      %p139 = scmp.eq.s32.totalorder %s15, 0
      %p140 = por %p138, %p139
      %p141 = scmp.ne.s32.totalorder %s133, %s135
      %p142 = scmp.eq.s32.totalorder %s20, 1
      %p143 = por %p141, %p142
      %p144 = scmp.ne.s32.totalorder %s135, %s136
      %p145 = scmp.eq.s32.totalorder %s20, 0
      %p146 = por %p144, %p145
      %p147 = scmp.ne.s32.totalorder %s135, %s136
      %p148 = scmp.eq.s32.totalorder %s21, 1
      %p149 = por %p147, %p148
      %p151 = scmp.ne.s32.totalorder %s136, %s150
      %p152 = scmp.eq.s32.totalorder %s21, 0
      %p153 = por %p151, %p152
      %s154 = ssub.s32 %s15, %s22
      %p155 = scmp.eq.s32.totalorder %s154, 0
      %s157 = sadd.s32 %s156, 1
      %s158 = scalar_select %p155, %s156, %s157
      %p161 = pneg %p155
      %p162 = scmp.eq.s32.totalorder %s15, 1
      %p163 = por %p161, %p162
      %p164 = scmp.ne.s32.totalorder %s156, %s159
      %p165 = scmp.eq.s32.totalorder %s15, 0
      %p166 = por %p164, %p165
      %p167 = scmp.ne.s32.totalorder %s156, %s159
      %p168 = scmp.eq.s32.totalorder %s20, 1
      %p169 = por %p167, %p168
      %p170 = scmp.ne.s32.totalorder %s159, %s160
      %p171 = scmp.eq.s32.totalorder %s20, 0
      %p172 = por %p170, %p171
      %p173 = scmp.ne.s32.totalorder %s159, %s160
      %p174 = scmp.eq.s32.totalorder %s21, 1
      %p175 = por %p173, %p174
      %p177 = scmp.ne.s32.totalorder %s160, %s176
      %p178 = scmp.eq.s32.totalorder %s21, 0
      %p179 = por %p177, %p178
      %p180 = scmp.le.s32.totalorder 1, %s15
      %p181 = scmp.lt.s32.totalorder %s15, 3
      %p182 = pnand %p180, %p181
      %p183 = pneg %p182
      // Predicated region
      $region9: #{tpu_custom_call.1} parent=5 // pred_check
        _
      $region10: #{tpu_custom_call.1} parent=5 // pred_check_branch
        %185 = sbr.rel (%p182) target = $region12
      $region11: #{tpu_custom_call.1} parent=5 // pred_region
        %s186 = ssub.s32 %s15, 1
        // Predicated region
        $region13: #{tpu_custom_call.1} parent=11 // pred_check
          %p187 = pneg %p62
        $region14: #{tpu_custom_call.1} parent=11 // pred_check_branch
          %189 = sbr.rel (%p187) target = $region16
        $region15: #{tpu_custom_call.1} parent=11 // pred_region
          _
        $region16: #{tpu_custom_call.1} parent=11 // pred_fallthru
          _
        // Predicated region
        $region17: #{tpu_custom_call.1} parent=11 // pred_check
          %p190 = pneg %p83
        $region18: #{tpu_custom_call.1} parent=11 // pred_check_branch
          %192 = sbr.rel (%p190) target = $region20
        $region19: #{tpu_custom_call.1} parent=11 // pred_region
          _
        $region20: #{tpu_custom_call.1} parent=11 // pred_fallthru
          _
        // Predicated region
        $region21: #{tpu_custom_call.1} parent=11 // pred_check
          %p193 = pneg %p104
        $region22: #{tpu_custom_call.1} parent=11 // pred_check_branch
          %195 = sbr.rel (%p193) target = $region24
        $region23: #{tpu_custom_call.1} parent=11 // pred_region
          _
        $region24: #{tpu_custom_call.1} parent=11 // pred_fallthru
          _
        // Predicated region
        $region25: #{tpu_custom_call.1} parent=11 // pred_check
          %p196 = pneg %p125
        $region26: #{tpu_custom_call.1} parent=11 // pred_check_branch
          %198 = sbr.rel (%p196) target = $region28
        $region27: #{tpu_custom_call.1} parent=11 // pred_region
          _
        $region28: #{tpu_custom_call.1} parent=11 // pred_fallthru
          _
        // Predicated region
        $region29: #{tpu_custom_call.1} parent=11 // pred_check
          %p199 = pneg %p146
        $region30: #{tpu_custom_call.1} parent=11 // pred_check_branch
          %201 = sbr.rel (%p199) target = $region32
        $region31: #{tpu_custom_call.1} parent=11 // pred_region
          _
        $region32: #{tpu_custom_call.1} parent=11 // pred_fallthru
          _
      $region12: #{tpu_custom_call.1} parent=5 // pred_fallthru
        _
      %p202 = scmp.lt.s32.totalorder %s15, 2
      // Predicated region
      $region33: #{tpu_custom_call.1} parent=5 // pred_check
        %p203 = pneg %p202
      $region34: #{tpu_custom_call.1} parent=5 // pred_check_branch
        %205 = sbr.rel (%p203) target = $region36
      $region35: #{tpu_custom_call.1} parent=5 // pred_region
        // Predicated region
        $region37: #{tpu_custom_call.1} parent=35 // pred_check
          %p206 = pneg %p35
        $region38: #{tpu_custom_call.1} parent=35 // pred_check_branch
          %208 = sbr.rel (%p206) target = $region40
        $region39: #{tpu_custom_call.1} parent=35 // pred_region
          %p209 = scmp.lt.s32.totalorder %s15, 1
          %s210 = scalar_select %p209, %s15, 1
          %s211 = smul.addr %s210, 2
          %s212 = smul.addr %s211, 8
          %s213 = scalar_lea.vmem %s0, %s212
        $region40: #{tpu_custom_call.1} parent=35 // pred_fallthru
          _
      $region36: #{tpu_custom_call.1} parent=5 // pred_fallthru
        _
      %p214 = scmp.le.s32.totalorder 1, %s15
      %p215 = scmp.lt.s32.totalorder %s15, 3
      %p216 = pnand %p214, %p215
      %p217 = pneg %p216
      // Predicated region
      $region41: #{tpu_custom_call.1} parent=5 // pred_check
        _
      $region42: #{tpu_custom_call.1} parent=5 // pred_check_branch
        %219 = sbr.rel (%p216) target = $region44
      $region43: #{tpu_custom_call.1} parent=5 // pred_region
        %s220 = ssub.s32 %s15, 1
        %p221 = scmp.lt.s32.totalorder %s20, 1
        %s222 = scalar_select %p221, %s20, 1
        %s223 = smul.addr %s222, 2
        %s224 = smul.addr %s223, 8
        %s225 = scalar_lea.vmem %s0, %s224
        %p226 = pneg %p41
        %p227 = pneg %p38
        %p228 = pneg %p62
        %p229 = pneg %p59
        %p230 = pneg %p83
        %p231 = pneg %p80
        %p232 = pneg %p104
        %p233 = pneg %p101
        %p234 = pneg %p125
        %p235 = pneg %p122
        %p236 = pneg %p146
        %p237 = pneg %p143
        %p238 = pneg %p172
        %p239 = pneg %p169
        %s240 = sand.u32 %s159, 1
        %s241 = scalar_lea.sflag [#allocation3], %s240
        %s242 = sand.u32 %s159, 1
        %s243 = smul.addr %s242, 16
        %s244 = scalar_lea.vmem [#allocation2], %s243
        %p245 = scmp.lt.s32.totalorder %s20, 1
        %s246 = scalar_select %p245, %s20, 1
        %s247 = smul.addr %s246, 2
        %s248 = smul.addr %s247, 8
        %s249 = scalar_lea.vmem %s0, %s248
        %v251 = vld [vmem:[%s1] sm:$0xf]
        %v252 = vld [vmem:[%s2] sm:$0xff]
        %v253 = vld [vmem:[%s249] sm:$0xff]
        %v254 = vld [vmem:[%s249 + $0x8] sm:$0xff]
        %v255 = vpack.c.bf16 %v253, %v253
        %v256 = vpack.c.bf16 %v254, %v254
        %258 = vset.pattern.permute.xlu0 0
        %259 = vperm.xlu0 %258, %v252
        %v260 = vpop.permute.xlu0 %259
        %vm262 = vcmask 64512
        %v264 = vsel %vm262, %v251, 0
        %vm266 = vcmask 1043456
        %v268 = vsel %vm266, %v255, 0
        %v271 = vsel %vm266, %v256, 0
        %273 = vmatprep.subr.bf16.mxu0 %v271
        %274 = vmatpush1.bf16.msra.mxu0 %v268
        %275 = vmatprep.subr.bf16.mxu0 0
        %276 = vmatpush1.bf16.msra.mxu0 0
        %277 = vmatprep.subr.bf16.mxu0 0
        %278 = vmatpush1.bf16.msra.mxu0 0
        %279 = vmatprep.subr.bf16.mxu0 0
        %280 = vmatpush1.bf16.msra.mxu0 0
        %281 = vmatprep.subr.bf16.mxu0 0
        %282 = vmatpush1.bf16.msra.mxu0 0
        %283 = vmatprep.subr.bf16.mxu0 0
        %284 = vmatpush1.bf16.msra.mxu0 0
        %285 = vmatprep.subr.bf16.mxu0 0
        %286 = vmatpush1.bf16.msra.mxu0 0
        %287 = vmatprep.subr.bf16.mxu0 0
        %288 = vmatpush1.bf16.msra.mxu0 0
        %289 = vmatprep.subr.bf16.mxu0 0
        %290 = vmatpush1.bf16.msra.mxu0 0
        %291 = vmatprep.subr.bf16.mxu0 0
        %292 = vmatpush1.bf16.msra.mxu0 0
        %293 = vmatprep.subr.bf16.mxu0 0
        %294 = vmatpush1.bf16.msra.mxu0 0
        %295 = vmatprep.subr.bf16.mxu0 0
        %296 = vmatpush1.bf16.msra.mxu0 0
        %297 = vmatprep.subr.bf16.mxu0 0
        %298 = vmatpush1.bf16.msra.mxu0 0
        %299 = vmatprep.subr.bf16.mxu0 0
        %300 = vmatpush1.bf16.msra.mxu0 0
        %301 = vmatprep.subr.bf16.mxu0 0
        %302 = vmatpush1.bf16.msra.mxu0 0
        %303 = vmatprep.subr.bf16.mxu0 0
        %304 = vmatpush1.bf16.msra.mxu0 0
        %305 = vmatprep.mubr.bf16.mxu0 0
        %306 = vmatmul.mubr.bf16.gmra.mrb[0].mxu0 %v264
        %v307 = vpop.f32.mrb[0].mxu0
        %v308 = vadd.f32 %v260, %v307
        %v309 = vpop.f32.mrb[0].mxu0
        %v310 = vadd.f32 %v260, %v309
        %v311 = vpop.f32.mrb[0].mxu0
        %v312 = vpop.f32.mrb[0].mxu0
        %313 = vdwg.mxu0
        %v314 = vmax.f32 %v308, 0.0
        %v315 = vmax.f32 %v310, 0.0
        %v316 = vpack.c.bf16 %v314, %v314
        %v317 = vpack.c.bf16 %v315, %v315
        %318 = vrot.lane.b32.xlu0 %v253, 17
        %v319 = vpop.permute.xlu0 %318
        %320 = vrot.lane.b32.xlu0 %v254, 17
        %v321 = vpop.permute.xlu0 %320
        %v322 = vlaneseq
        %v323 = vand.u32 %v322, 127
        %vm324 = vcmp.lt.s32.totalorder %v323, 17
        %v325 = vsel %vm324, %v319, %v321
        %v326 = vsel %vm324, %v321, %v319
        %v327 = vld [vmem:[%s3] sm:$0xf]
        %v328 = vld [vmem:[%s4] sm:$0xff]
        %330 = vset.pattern.permute.xlu0 0
        %331 = vperm.xlu0 %330, %v328
        %v332 = vpop.permute.xlu0 %331
        %v335 = vsel %vm262, %v327, 0
        %v338 = vsel %vm266, %v316, 0
        %v341 = vsel %vm266, %v317, 0
        %343 = vmatprep.subr.bf16.mxu0 %v341
        %344 = vmatpush1.bf16.msra.mxu0 %v338
        %345 = vmatprep.subr.bf16.mxu0 0
        %346 = vmatpush1.bf16.msra.mxu0 0
        %347 = vmatprep.subr.bf16.mxu0 0
        %348 = vmatpush1.bf16.msra.mxu0 0
        %349 = vmatprep.subr.bf16.mxu0 0
        %350 = vmatpush1.bf16.msra.mxu0 0
        %351 = vmatprep.subr.bf16.mxu0 0
        %352 = vmatpush1.bf16.msra.mxu0 0
        %353 = vmatprep.subr.bf16.mxu0 0
        %354 = vmatpush1.bf16.msra.mxu0 0
        %355 = vmatprep.subr.bf16.mxu0 0
        %356 = vmatpush1.bf16.msra.mxu0 0
        %357 = vmatprep.subr.bf16.mxu0 0
        %358 = vmatpush1.bf16.msra.mxu0 0
        %359 = vmatprep.subr.bf16.mxu0 0
        %360 = vmatpush1.bf16.msra.mxu0 0
        %361 = vmatprep.subr.bf16.mxu0 0
        %362 = vmatpush1.bf16.msra.mxu0 0
        %363 = vmatprep.subr.bf16.mxu0 0
        %364 = vmatpush1.bf16.msra.mxu0 0
        %365 = vmatprep.subr.bf16.mxu0 0
        %366 = vmatpush1.bf16.msra.mxu0 0
        %367 = vmatprep.subr.bf16.mxu0 0
        %368 = vmatpush1.bf16.msra.mxu0 0
        %369 = vmatprep.subr.bf16.mxu0 0
        %370 = vmatpush1.bf16.msra.mxu0 0
        %371 = vmatprep.subr.bf16.mxu0 0
        %372 = vmatpush1.bf16.msra.mxu0 0
        %373 = vmatprep.subr.bf16.mxu0 0
        %374 = vmatpush1.bf16.msra.mxu0 0
        %375 = vmatprep.mubr.bf16.mxu0 0
        %376 = vmatmul.mubr.bf16.gmra.mrb[0].mxu0 %v335
        %v377 = vpop.f32.mrb[0].mxu0
        %v378 = vadd.f32 %v332, %v377
        %v379 = vpop.f32.mrb[0].mxu0
        %v380 = vadd.f32 %v332, %v379
        %v381 = vpop.f32.mrb[0].mxu0
        %v382 = vpop.f32.mrb[0].mxu0
        %383 = vdwg.mxu0
        %v384 = vld [vmem:[%s5] sm:$0x3]
        %v386 = vlaneseq
        %v387 = vshrl.u32 %v386, 7
        %v388 = vsub.s32 0, %v387
        %v389 = vrot.slane %v384, %v388
        %v390 = vlaneseq
        %v391 = vshrl.u32 %v390, 7
        %v392 = vsub.s32 1, %v391
        %v393 = vrot.slane %v384, %v392
        %v396 = vmul.f32 %v378, %v389
        %v397 = vmul.f32 %v380, %v393
        %v398 = vmul.f32 %v326, %v396
        %v399 = vmul.f32 %v325, %v397
        %v400 = vadd.f32 %v398, 0.0
        %v401 = vadd.f32 %v399, 0.0
        %402 = vrot.lane.b32.xlu0 %v253, 16
        %v403 = vpop.permute.xlu0 %402
        %404 = vrot.lane.b32.xlu0 %v254, 16
        %v405 = vpop.permute.xlu0 %404
        %vm406 = vcmp.lt.s32.totalorder %v323, 16
        %v407 = vsel %vm406, %v403, %v405
        %v408 = vsel %vm406, %v405, %v403
        %s409 = scalar_lea.vmem %s3, 4
        %v410 = vld [vmem:[%s409] sm:$0xf]
        %s411 = scalar_lea.vmem %s4, 8
        %v412 = vld [vmem:[%s411] sm:$0xff]
        %414 = vset.pattern.permute.xlu0 0
        %415 = vperm.xlu0 %414, %v412
        %v416 = vpop.permute.xlu0 %415
        %v419 = vsel %vm262, %v410, 0
        %421 = vmatprep.subr.bf16.mxu0 %v341
        %422 = vmatpush1.bf16.msra.mxu0 %v338
        %423 = vmatprep.subr.bf16.mxu0 0
        %424 = vmatpush1.bf16.msra.mxu0 0
        %425 = vmatprep.subr.bf16.mxu0 0
        %426 = vmatpush1.bf16.msra.mxu0 0
        %427 = vmatprep.subr.bf16.mxu0 0
        %428 = vmatpush1.bf16.msra.mxu0 0
        %429 = vmatprep.subr.bf16.mxu0 0
        %430 = vmatpush1.bf16.msra.mxu0 0
        %431 = vmatprep.subr.bf16.mxu0 0
        %432 = vmatpush1.bf16.msra.mxu0 0
        %433 = vmatprep.subr.bf16.mxu0 0
        %434 = vmatpush1.bf16.msra.mxu0 0
        %435 = vmatprep.subr.bf16.mxu0 0
        %436 = vmatpush1.bf16.msra.mxu0 0
        %437 = vmatprep.subr.bf16.mxu0 0
        %438 = vmatpush1.bf16.msra.mxu0 0
        %439 = vmatprep.subr.bf16.mxu0 0
        %440 = vmatpush1.bf16.msra.mxu0 0
        %441 = vmatprep.subr.bf16.mxu0 0
        %442 = vmatpush1.bf16.msra.mxu0 0
        %443 = vmatprep.subr.bf16.mxu0 0
        %444 = vmatpush1.bf16.msra.mxu0 0
        %445 = vmatprep.subr.bf16.mxu0 0
        %446 = vmatpush1.bf16.msra.mxu0 0
        %447 = vmatprep.subr.bf16.mxu0 0
        %448 = vmatpush1.bf16.msra.mxu0 0
        %449 = vmatprep.subr.bf16.mxu0 0
        %450 = vmatpush1.bf16.msra.mxu0 0
        %451 = vmatprep.subr.bf16.mxu0 0
        %452 = vmatpush1.bf16.msra.mxu0 0
        %453 = vmatprep.mubr.bf16.mxu0 0
        %454 = vmatmul.mubr.bf16.gmra.mrb[0].mxu0 %v419
        %v455 = vpop.f32.mrb[0].mxu0
        %v456 = vadd.f32 %v416, %v455
        %v457 = vpop.f32.mrb[0].mxu0
        %v458 = vadd.f32 %v416, %v457
        %v459 = vpop.f32.mrb[0].mxu0
        %v460 = vpop.f32.mrb[0].mxu0
        %461 = vdwg.mxu0
        %s462 = scalar_lea.vmem %s5, 2
        %v463 = vld [vmem:[%s462] sm:$0x3]
        %v465 = vlaneseq
        %v466 = vshrl.u32 %v465, 7
        %v467 = vsub.s32 0, %v466
        %v468 = vrot.slane %v463, %v467
        %v469 = vlaneseq
        %v470 = vshrl.u32 %v469, 7
        %v471 = vsub.s32 1, %v470
        %v472 = vrot.slane %v463, %v471
        %v475 = vmul.f32 %v456, %v468
        %v476 = vmul.f32 %v458, %v472
        %v477 = vmul.f32 %v408, %v475
        %v478 = vmul.f32 %v407, %v476
        %v479 = vadd.f32 %v400, %v477
        %v480 = vadd.f32 %v401, %v478
        %481 = vrot.lane.b32.xlu0 %v253, 15
        %v482 = vpop.permute.xlu0 %481
        %483 = vrot.lane.b32.xlu0 %v254, 15
        %v484 = vpop.permute.xlu0 %483
        %vm485 = vcmp.lt.s32.totalorder %v323, 15
        %v486 = vsel %vm485, %v482, %v484
        %v487 = vsel %vm485, %v484, %v482
        %s488 = scalar_lea.vmem %s3, 8
        %v489 = vld [vmem:[%s488] sm:$0xf]
        %s490 = scalar_lea.vmem %s4, 16
        %v491 = vld [vmem:[%s490] sm:$0xff]
        %493 = vset.pattern.permute.xlu0 0
        %494 = vperm.xlu0 %493, %v491
        %v495 = vpop.permute.xlu0 %494
        %v498 = vsel %vm262, %v489, 0
        %500 = vmatprep.subr.bf16.mxu0 %v341
        %501 = vmatpush1.bf16.msra.mxu0 %v338
        %502 = vmatprep.subr.bf16.mxu0 0
        %503 = vmatpush1.bf16.msra.mxu0 0
        %504 = vmatprep.subr.bf16.mxu0 0
        %505 = vmatpush1.bf16.msra.mxu0 0
        %506 = vmatprep.subr.bf16.mxu0 0
        %507 = vmatpush1.bf16.msra.mxu0 0
        %508 = vmatprep.subr.bf16.mxu0 0
        %509 = vmatpush1.bf16.msra.mxu0 0
        %510 = vmatprep.subr.bf16.mxu0 0
        %511 = vmatpush1.bf16.msra.mxu0 0
        %512 = vmatprep.subr.bf16.mxu0 0
        %513 = vmatpush1.bf16.msra.mxu0 0
        %514 = vmatprep.subr.bf16.mxu0 0
        %515 = vmatpush1.bf16.msra.mxu0 0
        %516 = vmatprep.subr.bf16.mxu0 0
        %517 = vmatpush1.bf16.msra.mxu0 0
        %518 = vmatprep.subr.bf16.mxu0 0
        %519 = vmatpush1.bf16.msra.mxu0 0
        %520 = vmatprep.subr.bf16.mxu0 0
        %521 = vmatpush1.bf16.msra.mxu0 0
        %522 = vmatprep.subr.bf16.mxu0 0
        %523 = vmatpush1.bf16.msra.mxu0 0
        %524 = vmatprep.subr.bf16.mxu0 0
        %525 = vmatpush1.bf16.msra.mxu0 0
        %526 = vmatprep.subr.bf16.mxu0 0
        %527 = vmatpush1.bf16.msra.mxu0 0
        %528 = vmatprep.subr.bf16.mxu0 0
        %529 = vmatpush1.bf16.msra.mxu0 0
        %530 = vmatprep.subr.bf16.mxu0 0
        %531 = vmatpush1.bf16.msra.mxu0 0
        %532 = vmatprep.mubr.bf16.mxu0 0
        %533 = vmatmul.mubr.bf16.gmra.mrb[0].mxu0 %v498
        %v534 = vpop.f32.mrb[0].mxu0
        %v535 = vadd.f32 %v495, %v534
        %v536 = vpop.f32.mrb[0].mxu0
        %v537 = vadd.f32 %v495, %v536
        %v538 = vpop.f32.mrb[0].mxu0
        %v539 = vpop.f32.mrb[0].mxu0
        %540 = vdwg.mxu0
        %s541 = scalar_lea.vmem %s5, 4
        %v542 = vld [vmem:[%s541] sm:$0x3]
        %v544 = vlaneseq
        %v545 = vshrl.u32 %v544, 7
        %v546 = vsub.s32 0, %v545
        %v547 = vrot.slane %v542, %v546
        %v548 = vlaneseq
        %v549 = vshrl.u32 %v548, 7
        %v550 = vsub.s32 1, %v549
        %v551 = vrot.slane %v542, %v550
        %v554 = vmul.f32 %v535, %v547
        %v555 = vmul.f32 %v537, %v551
        %v556 = vmul.f32 %v487, %v554
        %v557 = vmul.f32 %v486, %v555
        %v558 = vadd.f32 %v479, %v556
        %v559 = vadd.f32 %v480, %v557
        %560 = vrot.lane.b32.xlu0 %v253, 1
        %v561 = vpop.permute.xlu0 %560
        %562 = vrot.lane.b32.xlu0 %v254, 1
        %v563 = vpop.permute.xlu0 %562
        %vm564 = vcmp.lt.s32.totalorder %v323, 1
        %v565 = vsel %vm564, %v561, %v563
        %v566 = vsel %vm564, %v563, %v561
        %s567 = scalar_lea.vmem %s3, 12
        %v568 = vld [vmem:[%s567] sm:$0xf]
        %s569 = scalar_lea.vmem %s4, 24
        %v570 = vld [vmem:[%s569] sm:$0xff]
        %572 = vset.pattern.permute.xlu0 0
        %573 = vperm.xlu0 %572, %v570
        %v574 = vpop.permute.xlu0 %573
        %v577 = vsel %vm262, %v568, 0
        %579 = vmatprep.subr.bf16.mxu0 %v341
        %580 = vmatpush1.bf16.msra.mxu0 %v338
        %581 = vmatprep.subr.bf16.mxu0 0
        %582 = vmatpush1.bf16.msra.mxu0 0
        %583 = vmatprep.subr.bf16.mxu0 0
        %584 = vmatpush1.bf16.msra.mxu0 0
        %585 = vmatprep.subr.bf16.mxu0 0
        %586 = vmatpush1.bf16.msra.mxu0 0
        %587 = vmatprep.subr.bf16.mxu0 0
        %588 = vmatpush1.bf16.msra.mxu0 0
        %589 = vmatprep.subr.bf16.mxu0 0
        %590 = vmatpush1.bf16.msra.mxu0 0
        %591 = vmatprep.subr.bf16.mxu0 0
        %592 = vmatpush1.bf16.msra.mxu0 0
        %593 = vmatprep.subr.bf16.mxu0 0
        %594 = vmatpush1.bf16.msra.mxu0 0
        %595 = vmatprep.subr.bf16.mxu0 0
        %596 = vmatpush1.bf16.msra.mxu0 0
        %597 = vmatprep.subr.bf16.mxu0 0
        %598 = vmatpush1.bf16.msra.mxu0 0
        %599 = vmatprep.subr.bf16.mxu0 0
        %600 = vmatpush1.bf16.msra.mxu0 0
        %601 = vmatprep.subr.bf16.mxu0 0
        %602 = vmatpush1.bf16.msra.mxu0 0
        %603 = vmatprep.subr.bf16.mxu0 0
        %604 = vmatpush1.bf16.msra.mxu0 0
        %605 = vmatprep.subr.bf16.mxu0 0
        %606 = vmatpush1.bf16.msra.mxu0 0
        %607 = vmatprep.subr.bf16.mxu0 0
        %608 = vmatpush1.bf16.msra.mxu0 0
        %609 = vmatprep.subr.bf16.mxu0 0
        %610 = vmatpush1.bf16.msra.mxu0 0
        %611 = vmatprep.mubr.bf16.mxu0 0
        %612 = vmatmul.mubr.bf16.gmra.mrb[0].mxu0 %v577
        %v613 = vpop.f32.mrb[0].mxu0
        %v614 = vadd.f32 %v574, %v613
        %v615 = vpop.f32.mrb[0].mxu0
        %v616 = vadd.f32 %v574, %v615
        %v617 = vpop.f32.mrb[0].mxu0
        %v618 = vpop.f32.mrb[0].mxu0
        %619 = vdwg.mxu0
        %s620 = scalar_lea.vmem %s5, 6
        %v621 = vld [vmem:[%s620] sm:$0x3]
        %v623 = vlaneseq
        %v624 = vshrl.u32 %v623, 7
        %v625 = vsub.s32 0, %v624
        %v626 = vrot.slane %v621, %v625
        %v627 = vlaneseq
        %v628 = vshrl.u32 %v627, 7
        %v629 = vsub.s32 1, %v628
        %v630 = vrot.slane %v621, %v629
        %v633 = vmul.f32 %v614, %v626
        %v634 = vmul.f32 %v616, %v630
        %v635 = vmul.f32 %v566, %v633
        %v636 = vmul.f32 %v565, %v634
        %v637 = vadd.f32 %v558, %v635
        %v638 = vadd.f32 %v559, %v636
        %s639 = scalar_lea.vmem %s3, 16
        %v640 = vld [vmem:[%s639] sm:$0xf]
        %s641 = scalar_lea.vmem %s4, 32
        %v642 = vld [vmem:[%s641] sm:$0xff]
        %644 = vset.pattern.permute.xlu0 0
        %645 = vperm.xlu0 %644, %v642
        %v646 = vpop.permute.xlu0 %645
        %v649 = vsel %vm262, %v640, 0
        %651 = vmatprep.subr.bf16.mxu0 %v341
        %652 = vmatpush1.bf16.msra.mxu0 %v338
        %653 = vmatprep.subr.bf16.mxu0 0
        %654 = vmatpush1.bf16.msra.mxu0 0
        %655 = vmatprep.subr.bf16.mxu0 0
        %656 = vmatpush1.bf16.msra.mxu0 0
        %657 = vmatprep.subr.bf16.mxu0 0
        %658 = vmatpush1.bf16.msra.mxu0 0
        %659 = vmatprep.subr.bf16.mxu0 0
        %660 = vmatpush1.bf16.msra.mxu0 0
        %661 = vmatprep.subr.bf16.mxu0 0
        %662 = vmatpush1.bf16.msra.mxu0 0
        %663 = vmatprep.subr.bf16.mxu0 0
        %664 = vmatpush1.bf16.msra.mxu0 0
        %665 = vmatprep.subr.bf16.mxu0 0
        %666 = vmatpush1.bf16.msra.mxu0 0
        %667 = vmatprep.subr.bf16.mxu0 0
        %668 = vmatpush1.bf16.msra.mxu0 0
        %669 = vmatprep.subr.bf16.mxu0 0
        %670 = vmatpush1.bf16.msra.mxu0 0
        %671 = vmatprep.subr.bf16.mxu0 0
        %672 = vmatpush1.bf16.msra.mxu0 0
        %673 = vmatprep.subr.bf16.mxu0 0
        %674 = vmatpush1.bf16.msra.mxu0 0
        %675 = vmatprep.subr.bf16.mxu0 0
        %676 = vmatpush1.bf16.msra.mxu0 0
        %677 = vmatprep.subr.bf16.mxu0 0
        %678 = vmatpush1.bf16.msra.mxu0 0
        %679 = vmatprep.subr.bf16.mxu0 0
        %680 = vmatpush1.bf16.msra.mxu0 0
        %681 = vmatprep.subr.bf16.mxu0 0
        %682 = vmatpush1.bf16.msra.mxu0 0
        %683 = vmatprep.mubr.bf16.mxu0 0
        %684 = vmatmul.mubr.bf16.gmra.mrb[0].mxu0 %v649
        %v685 = vpop.f32.mrb[0].mxu0
        %v686 = vadd.f32 %v646, %v685
        %v687 = vpop.f32.mrb[0].mxu0
        %v688 = vadd.f32 %v646, %v687
        %v689 = vpop.f32.mrb[0].mxu0
        %v690 = vpop.f32.mrb[0].mxu0
        %691 = vdwg.mxu0
        %s692 = scalar_lea.vmem %s5, 8
        %v693 = vld [vmem:[%s692] sm:$0x3]
        %v695 = vlaneseq
        %v696 = vshrl.u32 %v695, 7
        %v697 = vsub.s32 0, %v696
        %v698 = vrot.slane %v693, %v697
        %v699 = vlaneseq
        %v700 = vshrl.u32 %v699, 7
        %v701 = vsub.s32 1, %v700
        %v702 = vrot.slane %v693, %v701
        %v705 = vmul.f32 %v686, %v698
        %v706 = vmul.f32 %v688, %v702
        %v707 = vmul.f32 %v253, %v705
        %v708 = vmul.f32 %v254, %v706
        %v709 = vadd.f32 %v637, %v707
        %v710 = vadd.f32 %v638, %v708
        %711 = vrot.lane.b32.xlu0 %v253, 127
        %v712 = vpop.permute.xlu0 %711
        %713 = vrot.lane.b32.xlu0 %v254, 127
        %v714 = vpop.permute.xlu0 %713
        %vm715 = vcmp.lt.s32.totalorder %v323, 127
        %v716 = vsel %vm715, %v712, %v714
        %v717 = vsel %vm715, %v714, %v712
        %s718 = scalar_lea.vmem %s3, 20
        %v719 = vld [vmem:[%s718] sm:$0xf]
        %s720 = scalar_lea.vmem %s4, 40
        %v721 = vld [vmem:[%s720] sm:$0xff]
        %723 = vset.pattern.permute.xlu0 0
        %724 = vperm.xlu0 %723, %v721
        %v725 = vpop.permute.xlu0 %724
        %v728 = vsel %vm262, %v719, 0
        %730 = vmatprep.subr.bf16.mxu0 %v341
        %731 = vmatpush1.bf16.msra.mxu0 %v338
        %732 = vmatprep.subr.bf16.mxu0 0
        %733 = vmatpush1.bf16.msra.mxu0 0
        %734 = vmatprep.subr.bf16.mxu0 0
        %735 = vmatpush1.bf16.msra.mxu0 0
        %736 = vmatprep.subr.bf16.mxu0 0
        %737 = vmatpush1.bf16.msra.mxu0 0
        %738 = vmatprep.subr.bf16.mxu0 0
        %739 = vmatpush1.bf16.msra.mxu0 0
        %740 = vmatprep.subr.bf16.mxu0 0
        %741 = vmatpush1.bf16.msra.mxu0 0
        %742 = vmatprep.subr.bf16.mxu0 0
        %743 = vmatpush1.bf16.msra.mxu0 0
        %744 = vmatprep.subr.bf16.mxu0 0
        %745 = vmatpush1.bf16.msra.mxu0 0
        %746 = vmatprep.subr.bf16.mxu0 0
        %747 = vmatpush1.bf16.msra.mxu0 0
        %748 = vmatprep.subr.bf16.mxu0 0
        %749 = vmatpush1.bf16.msra.mxu0 0
        %750 = vmatprep.subr.bf16.mxu0 0
        %751 = vmatpush1.bf16.msra.mxu0 0
        %752 = vmatprep.subr.bf16.mxu0 0
        %753 = vmatpush1.bf16.msra.mxu0 0
        %754 = vmatprep.subr.bf16.mxu0 0
        %755 = vmatpush1.bf16.msra.mxu0 0
        %756 = vmatprep.subr.bf16.mxu0 0
        %757 = vmatpush1.bf16.msra.mxu0 0
        %758 = vmatprep.subr.bf16.mxu0 0
        %759 = vmatpush1.bf16.msra.mxu0 0
        %760 = vmatprep.subr.bf16.mxu0 0
        %761 = vmatpush1.bf16.msra.mxu0 0
        %762 = vmatprep.mubr.bf16.mxu0 0
        %763 = vmatmul.mubr.bf16.gmra.mrb[0].mxu0 %v728
        %v764 = vpop.f32.mrb[0].mxu0
        %v765 = vadd.f32 %v725, %v764
        %v766 = vpop.f32.mrb[0].mxu0
        %v767 = vadd.f32 %v725, %v766
        %v768 = vpop.f32.mrb[0].mxu0
        %v769 = vpop.f32.mrb[0].mxu0
        %770 = vdwg.mxu0
        %s771 = scalar_lea.vmem %s5, 10
        %v772 = vld [vmem:[%s771] sm:$0x3]
        %v774 = vlaneseq
        %v775 = vshrl.u32 %v774, 7
        %v776 = vsub.s32 0, %v775
        %v777 = vrot.slane %v772, %v776
        %v778 = vlaneseq
        %v779 = vshrl.u32 %v778, 7
        %v780 = vsub.s32 1, %v779
        %v781 = vrot.slane %v772, %v780
        %v784 = vmul.f32 %v765, %v777
        %v785 = vmul.f32 %v767, %v781
        %v786 = vmul.f32 %v716, %v784
        %v787 = vmul.f32 %v717, %v785
        %v788 = vadd.f32 %v709, %v786
        %v789 = vadd.f32 %v710, %v787
        %790 = vrot.lane.b32.xlu0 %v253, 113
        %v791 = vpop.permute.xlu0 %790
        %792 = vrot.lane.b32.xlu0 %v254, 113
        %v793 = vpop.permute.xlu0 %792
        %vm794 = vcmp.lt.s32.totalorder %v323, 113
        %v795 = vsel %vm794, %v791, %v793
        %v796 = vsel %vm794, %v793, %v791
        %s797 = scalar_lea.vmem %s3, 24
        %v798 = vld [vmem:[%s797] sm:$0xf]
        %s799 = scalar_lea.vmem %s4, 48
        %v800 = vld [vmem:[%s799] sm:$0xff]
        %802 = vset.pattern.permute.xlu0 0
        %803 = vperm.xlu0 %802, %v800
        %v804 = vpop.permute.xlu0 %803
        %v807 = vsel %vm262, %v798, 0
        %809 = vmatprep.subr.bf16.mxu0 %v341
        %810 = vmatpush1.bf16.msra.mxu0 %v338
        %811 = vmatprep.subr.bf16.mxu0 0
        %812 = vmatpush1.bf16.msra.mxu0 0
        %813 = vmatprep.subr.bf16.mxu0 0
        %814 = vmatpush1.bf16.msra.mxu0 0
        %815 = vmatprep.subr.bf16.mxu0 0
        %816 = vmatpush1.bf16.msra.mxu0 0
        %817 = vmatprep.subr.bf16.mxu0 0
        %818 = vmatpush1.bf16.msra.mxu0 0
        %819 = vmatprep.subr.bf16.mxu0 0
        %820 = vmatpush1.bf16.msra.mxu0 0
        %821 = vmatprep.subr.bf16.mxu0 0
        %822 = vmatpush1.bf16.msra.mxu0 0
        %823 = vmatprep.subr.bf16.mxu0 0
        %824 = vmatpush1.bf16.msra.mxu0 0
        %825 = vmatprep.subr.bf16.mxu0 0
        %826 = vmatpush1.bf16.msra.mxu0 0
        %827 = vmatprep.subr.bf16.mxu0 0
        %828 = vmatpush1.bf16.msra.mxu0 0
        %829 = vmatprep.subr.bf16.mxu0 0
        %830 = vmatpush1.bf16.msra.mxu0 0
        %831 = vmatprep.subr.bf16.mxu0 0
        %832 = vmatpush1.bf16.msra.mxu0 0
        %833 = vmatprep.subr.bf16.mxu0 0
        %834 = vmatpush1.bf16.msra.mxu0 0
        %835 = vmatprep.subr.bf16.mxu0 0
        %836 = vmatpush1.bf16.msra.mxu0 0
        %837 = vmatprep.subr.bf16.mxu0 0
        %838 = vmatpush1.bf16.msra.mxu0 0
        %839 = vmatprep.subr.bf16.mxu0 0
        %840 = vmatpush1.bf16.msra.mxu0 0
        %841 = vmatprep.mubr.bf16.mxu0 0
        %842 = vmatmul.mubr.bf16.gmra.mrb[0].mxu0 %v807
        %v843 = vpop.f32.mrb[0].mxu0
        %v844 = vadd.f32 %v804, %v843
        %v845 = vpop.f32.mrb[0].mxu0
        %v846 = vadd.f32 %v804, %v845
        %v847 = vpop.f32.mrb[0].mxu0
        %v848 = vpop.f32.mrb[0].mxu0
        %849 = vdwg.mxu0
        %s850 = scalar_lea.vmem %s5, 12
        %v851 = vld [vmem:[%s850] sm:$0x3]
        %v853 = vlaneseq
        %v854 = vshrl.u32 %v853, 7
        %v855 = vsub.s32 0, %v854
        %v856 = vrot.slane %v851, %v855
        %v857 = vlaneseq
        %v858 = vshrl.u32 %v857, 7
        %v859 = vsub.s32 1, %v858
        %v860 = vrot.slane %v851, %v859
        %v863 = vmul.f32 %v844, %v856
        %v864 = vmul.f32 %v846, %v860
        %v865 = vmul.f32 %v795, %v863
        %v866 = vmul.f32 %v796, %v864
        %v867 = vadd.f32 %v788, %v865
        %v868 = vadd.f32 %v789, %v866
        %869 = vrot.lane.b32.xlu0 %v253, 112
        %v870 = vpop.permute.xlu0 %869
        %871 = vrot.lane.b32.xlu0 %v254, 112
        %v872 = vpop.permute.xlu0 %871
        %vm873 = vcmp.lt.s32.totalorder %v323, 112
        %v874 = vsel %vm873, %v870, %v872
        %v875 = vsel %vm873, %v872, %v870
        %s876 = scalar_lea.vmem %s3, 28
        %v877 = vld [vmem:[%s876] sm:$0xf]
        %s878 = scalar_lea.vmem %s4, 56
        %v879 = vld [vmem:[%s878] sm:$0xff]
        %881 = vset.pattern.permute.xlu0 0
        %882 = vperm.xlu0 %881, %v879
        %v883 = vpop.permute.xlu0 %882
        %v886 = vsel %vm262, %v877, 0
        %888 = vmatprep.subr.bf16.mxu0 %v341
        %889 = vmatpush1.bf16.msra.mxu0 %v338
        %890 = vmatprep.subr.bf16.mxu0 0
        %891 = vmatpush1.bf16.msra.mxu0 0
        %892 = vmatprep.subr.bf16.mxu0 0
        %893 = vmatpush1.bf16.msra.mxu0 0
        %894 = vmatprep.subr.bf16.mxu0 0
        %895 = vmatpush1.bf16.msra.mxu0 0
        %896 = vmatprep.subr.bf16.mxu0 0
        %897 = vmatpush1.bf16.msra.mxu0 0
        %898 = vmatprep.subr.bf16.mxu0 0
        %899 = vmatpush1.bf16.msra.mxu0 0
        %900 = vmatprep.subr.bf16.mxu0 0
        %901 = vmatpush1.bf16.msra.mxu0 0
        %902 = vmatprep.subr.bf16.mxu0 0
        %903 = vmatpush1.bf16.msra.mxu0 0
        %904 = vmatprep.subr.bf16.mxu0 0
        %905 = vmatpush1.bf16.msra.mxu0 0
        %906 = vmatprep.subr.bf16.mxu0 0
        %907 = vmatpush1.bf16.msra.mxu0 0
        %908 = vmatprep.subr.bf16.mxu0 0
        %909 = vmatpush1.bf16.msra.mxu0 0
        %910 = vmatprep.subr.bf16.mxu0 0
        %911 = vmatpush1.bf16.msra.mxu0 0
        %912 = vmatprep.subr.bf16.mxu0 0
        %913 = vmatpush1.bf16.msra.mxu0 0
        %914 = vmatprep.subr.bf16.mxu0 0
        %915 = vmatpush1.bf16.msra.mxu0 0
        %916 = vmatprep.subr.bf16.mxu0 0
        %917 = vmatpush1.bf16.msra.mxu0 0
        %918 = vmatprep.subr.bf16.mxu0 0
        %919 = vmatpush1.bf16.msra.mxu0 0
        %920 = vmatprep.mubr.bf16.mxu0 0
        %921 = vmatmul.mubr.bf16.gmra.mrb[0].mxu0 %v886
        %v922 = vpop.f32.mrb[0].mxu0
        %v923 = vadd.f32 %v883, %v922
        %v924 = vpop.f32.mrb[0].mxu0
        %v925 = vadd.f32 %v883, %v924
        %v926 = vpop.f32.mrb[0].mxu0
        %v927 = vpop.f32.mrb[0].mxu0
        %928 = vdwg.mxu0
        %s929 = scalar_lea.vmem %s5, 14
        %v930 = vld [vmem:[%s929] sm:$0x3]
        %v932 = vlaneseq
        %v933 = vshrl.u32 %v932, 7
        %v934 = vsub.s32 0, %v933
        %v935 = vrot.slane %v930, %v934
        %v936 = vlaneseq
        %v937 = vshrl.u32 %v936, 7
        %v938 = vsub.s32 1, %v937
        %v939 = vrot.slane %v930, %v938
        %v942 = vmul.f32 %v923, %v935
        %v943 = vmul.f32 %v925, %v939
        %v944 = vmul.f32 %v874, %v942
        %v945 = vmul.f32 %v875, %v943
        %v946 = vadd.f32 %v867, %v944
        %v947 = vadd.f32 %v868, %v945
        %948 = vrot.lane.b32.xlu0 %v253, 111
        %v949 = vpop.permute.xlu0 %948
        %950 = vrot.lane.b32.xlu0 %v254, 111
        %v951 = vpop.permute.xlu0 %950
        %vm952 = vcmp.lt.s32.totalorder %v323, 111
        %v953 = vsel %vm952, %v949, %v951
        %v954 = vsel %vm952, %v951, %v949
        %s955 = scalar_lea.vmem %s3, 32
        %v956 = vld [vmem:[%s955] sm:$0xf]
        %s957 = scalar_lea.vmem %s4, 64
        %v958 = vld [vmem:[%s957] sm:$0xff]
        %960 = vset.pattern.permute.xlu0 0
        %961 = vperm.xlu0 %960, %v958
        %v962 = vpop.permute.xlu0 %961
        %v965 = vsel %vm262, %v956, 0
        %967 = vmatprep.subr.bf16.mxu0 %v341
        %968 = vmatpush1.bf16.msra.mxu0 %v338
        %969 = vmatprep.subr.bf16.mxu0 0
        %970 = vmatpush1.bf16.msra.mxu0 0
        %971 = vmatprep.subr.bf16.mxu0 0
        %972 = vmatpush1.bf16.msra.mxu0 0
        %973 = vmatprep.subr.bf16.mxu0 0
        %974 = vmatpush1.bf16.msra.mxu0 0
        %975 = vmatprep.subr.bf16.mxu0 0
        %976 = vmatpush1.bf16.msra.mxu0 0
        %977 = vmatprep.subr.bf16.mxu0 0
        %978 = vmatpush1.bf16.msra.mxu0 0
        %979 = vmatprep.subr.bf16.mxu0 0
        %980 = vmatpush1.bf16.msra.mxu0 0
        %981 = vmatprep.subr.bf16.mxu0 0
        %982 = vmatpush1.bf16.msra.mxu0 0
        %983 = vmatprep.subr.bf16.mxu0 0
        %984 = vmatpush1.bf16.msra.mxu0 0
        %985 = vmatprep.subr.bf16.mxu0 0
        %986 = vmatpush1.bf16.msra.mxu0 0
        %987 = vmatprep.subr.bf16.mxu0 0
        %988 = vmatpush1.bf16.msra.mxu0 0
        %989 = vmatprep.subr.bf16.mxu0 0
        %990 = vmatpush1.bf16.msra.mxu0 0
        %991 = vmatprep.subr.bf16.mxu0 0
        %992 = vmatpush1.bf16.msra.mxu0 0
        %993 = vmatprep.subr.bf16.mxu0 0
        %994 = vmatpush1.bf16.msra.mxu0 0
        %995 = vmatprep.subr.bf16.mxu0 0
        %996 = vmatpush1.bf16.msra.mxu0 0
        %997 = vmatprep.subr.bf16.mxu0 0
        %998 = vmatpush1.bf16.msra.mxu0 0
        %999 = vmatprep.mubr.bf16.mxu0 0
        %1000 = vmatmul.mubr.bf16.gmra.mrb[0].mxu0 %v965
        %v1001 = vpop.f32.mrb[0].mxu0
        %v1002 = vadd.f32 %v962, %v1001
        %v1003 = vpop.f32.mrb[0].mxu0
        %v1004 = vadd.f32 %v962, %v1003
        %v1005 = vpop.f32.mrb[0].mxu0
        %v1006 = vpop.f32.mrb[0].mxu0
        %1007 = vdwg.mxu0
        %s1008 = scalar_lea.vmem %s5, 16
        %v1009 = vld [vmem:[%s1008] sm:$0x3]
        %v1011 = vlaneseq
        %v1012 = vshrl.u32 %v1011, 7
        %v1013 = vsub.s32 0, %v1012
        %v1014 = vrot.slane %v1009, %v1013
        %v1015 = vlaneseq
        %v1016 = vshrl.u32 %v1015, 7
        %v1017 = vsub.s32 1, %v1016
        %v1018 = vrot.slane %v1009, %v1017
        %v1021 = vmul.f32 %v1002, %v1014
        %v1022 = vmul.f32 %v1004, %v1018
        %v1023 = vmul.f32 %v953, %v1021
        %v1024 = vmul.f32 %v954, %v1022
        %v1025 = vadd.f32 %v946, %v1023
        %v1026 = vadd.f32 %v947, %v1024
        %1027 = vst [vmem:[%s244] sm:$0xff] %v1025
        %1028 = vst [vmem:[%s244 + $0x8] sm:$0xff] %v1026
        %s1029 = sand.u32 %s159, 1
        %s1030 = scalar_lea.sflag [#allocation3], %s1029
        %s1031 = sand.u32 %s159, 1
        %s1032 = smul.addr %s1031, 16
        %s1033 = scalar_lea.vmem [#allocation2], %s1032
        // Predicated region
        $region45: #{tpu_custom_call.1} parent=43 // pred_check
          %p1034 = pneg %p169
        $region46: #{tpu_custom_call.1} parent=43 // pred_check_branch
          %1036 = sbr.rel (%p1034) target = $region48
        $region47: #{tpu_custom_call.1} parent=43 // pred_region
          %s1038 = ssub.s32 256, 256
          %1039 = vsyncadd %s1030, %s1038
          %s1040 = smul.addr %s20, 2
          %s1041 = smul.addr %s1040, 128
          %s1042 = scalar_lea.hbm %s6, %s1041
          %s1044 = sshll.u32 %s1033, 4
          %s1045 = int_to_ptr.vmem [resolvable:$true] %s1044
          %1047 = dma.vmem_to_hbm [thread:$0]  %s1045, 256, %s1042, %s1030
        $region48: #{tpu_custom_call.1} parent=43 // pred_fallthru
          _
      $region44: #{tpu_custom_call.1} parent=5 // pred_fallthru
        _
      %p1048 = scmp.le.s32.totalorder 2, %s15
      // Predicated region
      $region49: #{tpu_custom_call.1} parent=5 // pred_check
        %p1049 = pneg %p1048
      $region50: #{tpu_custom_call.1} parent=5 // pred_check_branch
        %1051 = sbr.rel (%p1049) target = $region52
      $region51: #{tpu_custom_call.1} parent=5 // pred_region
        %s1052 = ssub.s32 %s15, 2
        // Predicated region
        $region53: #{tpu_custom_call.1} parent=51 // pred_check
          %p1053 = pneg %p175
        $region54: #{tpu_custom_call.1} parent=51 // pred_check_branch
          %1055 = sbr.rel (%p1053) target = $region56
        $region55: #{tpu_custom_call.1} parent=51 // pred_region
          %s1056 = sand.u32 %s160, 1
          %s1057 = scalar_lea.sflag [#allocation3], %s1056
          %s1058 = sand.u32 %s160, 1
          %s1059 = smul.addr %s1058, 16
          %s1060 = scalar_lea.vmem [#allocation2], %s1059
          %1061 = dma.done %s1057, 256
        $region56: #{tpu_custom_call.1} parent=51 // pred_fallthru
          _
      $region52: #{tpu_custom_call.1} parent=5 // pred_fallthru
        _
    $region6: #{tpu_custom_call.1} parent=1 // loop_footer
      %s19 = sadd.s32 1, %s15
    $region7: #{tpu_custom_call.1} parent=1 // loop_footer_branch
      %14 = sbr.rel target = $region3
    $region8: #{tpu_custom_call.1} parent=1 // loop_exit
      _
    %1062 = vsyncpa [#allocation3], 1
    %s1063 = scalar_lea.sflag [#allocation3], 1
    %1064 = vsyncpa %s1063, 1

</llo_original>
